<compile_context>
chip_gen: v7x
topology: tpu7x:2x2x1
jax: 0.10.0
libtpu: 0.0.40
codegen_flags: <defaults>
</compile_context>

<pallas_src>
import functools

import jax
import jax.numpy as jnp
from jax import lax
from jax.experimental import pallas as pl
from jax.experimental.pallas import tpu as pltpu


def _round_up(x, m):
    return ((x + m - 1) // m) * m


def _moving_avg_kernel(x_hbm, o_ref, win_ref, sem, *,
                       L, kernel_size, stride, pad,
                       TO, TN, WROWS, PAD_TOP, PAD_BOT, n_time_tiles):
    """One grid step computes a (TO, TN) output tile.

    x_hbm  : (L, Np) input, left in HBM (pl.ANY)
    o_ref  : (TO, TN) output tile (auto-pipelined)
    win_ref: (2, PAD_TOP + WROWS + PAD_BOT, TN) double-buffered window scratch
    sem    : (2,) DMA semaphores
    """
    jl = pl.program_id(0)          # lane tile  (parallel / megacore axis)
    i = pl.program_id(1)           # time tile  (sequential, manually pipelined)
    lane0 = pl.multiple_of(jl * TN, 128)

    def window_start(ti):
        ws = ti * TO * stride - pad                  # window start, unpadded coords
        a = jnp.clip(ws, 0, L - WROWS)               # clamped DMA start
        return ws, a

    def issue(ti, slot):
        _, a = window_start(ti)
        pltpu.make_async_copy(
            x_hbm.at[pl.ds(a, WROWS), pl.ds(lane0, TN)],
            win_ref.at[slot, pl.ds(PAD_TOP, WROWS), :],
            sem.at[slot],
        ).start()

    slot = lax.rem(i, 2)

    # First step of the (sequential) time axis on this core: fetch our own window.
    @pl.when(i == 0)
    def _():
        issue(i, slot)

    ws, a = window_start(i)
    base = ws - a                                     # >= -pad

    # Wait for this step's window (issued here if i==0, else at step i-1).
    pltpu.make_async_copy(
        x_hbm.at[pl.ds(a, WROWS), pl.ds(lane0, TN)],
        win_ref.at[slot, pl.ds(PAD_TOP, WROWS), :],
        sem.at[slot],
    ).wait()

    # Prefetch the next time tile's window into the other slot (double buffer).
    @pl.when(i + 1 < n_time_tiles)
    def _():
        issue(i + 1, 1 - slot)

    buf = win_ref.at[slot]   # (PAD_TOP + WROWS + PAD_BOT, TN)

    # Fused edge replication: fill headrooms with the first / last fetched row.
    # Whenever a row that contributes to the real output reads the headroom,
    # these equal x[0] / x[L-1] (the clamped DMA start guarantees it).
    if PAD_TOP > 0:
        row0 = buf[pl.ds(PAD_TOP, 1), :]
        buf[pl.ds(0, PAD_TOP), :] = jnp.broadcast_to(row0, (PAD_TOP, TN))
    if PAD_BOT > 0:
        rowl = buf[pl.ds(PAD_TOP + WROWS - 1, 1), :]
        buf[pl.ds(PAD_TOP + WROWS, PAD_BOT), :] = jnp.broadcast_to(rowl, (PAD_BOT, TN))

    # k-tap accumulation: each tap is a plain (optionally strided) slice of the
    # locally padded window.  TODO(synk): for stride>1 a contiguous load +
    # value-level subsample (or pltpu.roll-based shifts) would avoid strided
    # sublane loads; kept simple since the common decomposition case is stride=1.
    acc = jnp.zeros((TO, TN), jnp.float32)
    for j in range(kernel_size):
        start = PAD_TOP + base + j
        if stride == 1:
            tap = buf[pl.ds(start, TO), :]
        else:
            tap = buf[pl.ds(start, TO, stride=stride), :]
        acc = acc + tap.astype(jnp.float32)

    o_ref[...] = (acc * (1.0 / kernel_size)).astype(o_ref.dtype)


def moving_avg(x, kernel_size, stride=1):
    """Pallas implementation of moving_avg.forward. x: (B, L, C)."""
    B, L, C = x.shape
    pad = (kernel_size - 1) // 2
    L_pad = L + 2 * pad
    L_out = (L_pad - kernel_size) // stride + 1
    assert L_out >= 1

    # --- lane-dense layout: (B, L, C) -> (L, B*C), lanes padded to 128 ---
    N = B * C
    xt = jnp.transpose(x, (1, 0, 2)).reshape(L, N)
    if N <= 512:
        TN = _round_up(N, 128)
        Np = TN
    else:
        TN = 512
        Np = _round_up(N, TN)
    if Np != N:
        xt = jnp.pad(xt, ((0, 0), (0, Np - N)))
    n_lane_tiles = Np // TN

    # --- time tiling: bounds VMEM independent of L, gives pipeline depth ---
    TO = min(512, _round_up(L_out, 8))               # output rows per tile
    n_time_tiles = pl.cdiv(L_out, TO)

    # Input window needed per output tile (never more than L real rows).
    WIN = (TO - 1) * stride + kernel_size
    WROWS = min(_round_up(WIN, 8), L)

    # Static headroom sizes so every tap read stays inside the scratch:
    #   top    : replicated x[0] for the left edge,
    #   bottom : replicated x[L-1] for the right edge + overhang of a partial
    #            last tile (exact worst-case read computed over all tiles).
    PAD_TOP = _round_up(pad, 8) if pad > 0 else 0
    max_rel_read = 0
    for ti in range(n_time_tiles):
        ws = ti * TO * stride - pad
        a = min(max(ws, 0), L - WROWS)
        max_rel_read = max(max_rel_read, ws + WIN - 1 - a)
    bot = max(0, max_rel_read - (WROWS - 1))
    PAD_BOT = _round_up(bot, 8) if bot > 0 else 0
    SCR_ROWS = PAD_TOP + WROWS + PAD_BOT

    kernel = functools.partial(
        _moving_avg_kernel,
        L=L, kernel_size=kernel_size, stride=stride, pad=pad,
        TO=TO, TN=TN, WROWS=WROWS,
        PAD_TOP=PAD_TOP, PAD_BOT=PAD_BOT, n_time_tiles=n_time_tiles)

    itemsize = jnp.dtype(x.dtype).itemsize
    vmem_bytes = 2 * SCR_ROWS * TN * itemsize + 2 * TO * TN * itemsize + (2 << 20)
    vmem_limit = int(min(max(vmem_bytes, 32 << 20), 48 << 20))

    out = pl.pallas_call(
        kernel,
        out_shape=jax.ShapeDtypeStruct((n_time_tiles * TO, Np), x.dtype),
        grid=(n_lane_tiles, n_time_tiles),
        in_specs=[pl.BlockSpec(memory_space=pl.ANY)],      # stays in HBM; manual DMA
        out_specs=pl.BlockSpec((TO, TN), lambda jl, i: (i, jl)),
        scratch_shapes=[
            pltpu.VMEM((2, SCR_ROWS, TN), x.dtype),         # double-buffered window
            pltpu.SemaphoreType.DMA((2,)),
        ],
        compiler_params=pltpu.CompilerParams(
            dimension_semantics=("parallel", "arbitrary"),
            vmem_limit_bytes=vmem_limit),
    )(xt)

    out = out[:L_out, :N].reshape(L_out, B, C)
    return jnp.transpose(out, (1, 0, 2))


def _reference_moving_avg(x, kernel_size, stride=1):
    """Pure-JAX reference mirroring the PyTorch module."""
    pad = (kernel_size - 1) // 2
    front = jnp.repeat(x[:, 0:1, :], pad, axis=1)
    end = jnp.repeat(x[:, -1:, :], pad, axis=1)
    xp = jnp.concatenate([front, x, end], axis=1)
    L_pad = xp.shape[1]
    L_out = (L_pad - kernel_size) // stride + 1
    taps = [xp[:, j: j + (L_out - 1) * stride + 1: stride, :]
            for j in range(kernel_size)]
    return jnp.mean(jnp.stack(taps, axis=0), axis=0)


if __name__ == "__main__":
    key = jax.random.PRNGKey(0)

    # Primary small case consistent with the module's (batch, seq_len, channels) use.
    B, L, C = 2, 8, 32
    kernel_size, stride = 5, 1
    x = jax.random.normal(key, (B, L, C), dtype=jnp.float32)
    out = jax.block_until_ready(moving_avg(x, kernel_size, stride))
    ref = _reference_moving_avg(x, kernel_size, stride)
    assert out.shape == ref.shape, (out.shape, ref.shape)
    assert jnp.allclose(out, ref, atol=1e-5, rtol=1e-5), "mismatch vs reference"

    # Extra configs exercising large trend window, even kernel + stride, and
    # multi-time-tile (partial last tile) paths.
    for (b, l, c, k, s) in [(2, 96, 32, 25, 1), (2, 32, 32, 6, 2), (4, 1200, 7, 25, 1)]:
        key, sub = jax.random.split(key)
        xi = jax.random.normal(sub, (b, l, c), dtype=jnp.float32)
        oi = jax.block_until_ready(moving_avg(xi, k, s))
        ri = _reference_moving_avg(xi, k, s)
        assert oi.shape == ri.shape, (oi.shape, ri.shape)
        assert jnp.allclose(oi, ri, atol=1e-4, rtol=1e-4), (b, l, c, k, s)

    print("KERNEL_OK")
</pallas_src>

<mosaic_0001>
module attributes {stable_mosaic.version = 11 : i64} {
  func.func @_moving_avg_kernel(%arg0: i32, %arg1: i32, %arg2: memref<8x128xf32, #tpu.memory_space<any>>, %arg3: memref<8x128xf32, #tpu.memory_space<vmem>>, %arg4: memref<2x24x128xf32, #tpu.memory_space<vmem>>, %arg5: memref<2x!tpu.dma_semaphore, #tpu.memory_space<semaphore_mem>>) attributes {dimension_semantics = [#tpu.dimension_semantics<parallel>, #tpu.dimension_semantics<arbitrary>], iteration_bounds = array<i64: 1, 1>, scalar_prefetch = 0 : i64, scratch_operands = 2 : i64, tpu.core_type = #tpu.core_type<tc>, window_params = [{}, {transform_indices = @transform_1, window_bounds = array<i64: 8, 128>}]} {
    %c128_i32 = arith.constant 128 : i32
    %0 = arith.muli %arg0, %c128_i32 : i32
    %1 = tpu.assume_multiple %0, 128 : i32
    %c2_i32 = arith.constant 2 : i32
    %2 = arith.remsi %arg1, %c2_i32 : i32
    %c0_i32 = arith.constant 0 : i32
    %3 = arith.cmpi eq, %arg1, %c0_i32 : i32
    %4 = arith.extui %3 : i1 to i32
    %c0_i32_0 = arith.constant 0 : i32
    %5 = arith.cmpi ne, %4, %c0_i32_0 : i32
    scf.if %5 {
      %c8_i32_47 = arith.constant 8 : i32
      %76 = arith.muli %arg1, %c8_i32_47 : i32
      %c1_i32_48 = arith.constant 1 : i32
      %77 = arith.muli %76, %c1_i32_48 : i32
      %c2_i32_49 = arith.constant 2 : i32
      %78 = arith.subi %77, %c2_i32_49 : i32
      %c0_i32_50 = arith.constant 0 : i32
      %c0_i32_51 = arith.constant 0 : i32
      %79 = arith.maxsi %c0_i32_50, %78 : i32
      %80 = arith.minsi %c0_i32_51, %79 : i32
      %81 = tpu.memref_slice %arg2[%80, %1] : memref<8x128xf32, #tpu.memory_space<any>> -> memref<8x128xf32, #tpu.memory_space<any>>
      %c8_i32_52 = arith.constant 8 : i32
      %c0_i32_53 = arith.constant 0 : i32
      %82 = tpu.memref_slice %arg4[%2, %c8_i32_52, %c0_i32_53] : memref<2x24x128xf32, #tpu.memory_space<vmem>> -> memref<1x8x128xf32, #tpu.memory_space<vmem>>
      %83 = tpu.memref_squeeze %82 : memref<1x8x128xf32, #tpu.memory_space<vmem>> -> memref<8x128xf32, #tpu.memory_space<vmem>>
      %84 = tpu.memref_slice %arg5[%2] : memref<2x!tpu.dma_semaphore, #tpu.memory_space<semaphore_mem>> -> memref<1x!tpu.dma_semaphore, #tpu.memory_space<semaphore_mem>>
      %85 = tpu.memref_squeeze %84 : memref<1x!tpu.dma_semaphore, #tpu.memory_space<semaphore_mem>> -> memref<!tpu.dma_semaphore, #tpu.memory_space<semaphore_mem>>
      tpu.enqueue_dma source(%81 : memref<8x128xf32, #tpu.memory_space<any>>) target(%83 : memref<8x128xf32, #tpu.memory_space<vmem>>) target_semaphore(%85 : memref<!tpu.dma_semaphore, #tpu.memory_space<semaphore_mem>>)
    } else {
    }
    %c8_i32 = arith.constant 8 : i32
    %6 = arith.muli %arg1, %c8_i32 : i32
    %c1_i32 = arith.constant 1 : i32
    %7 = arith.muli %6, %c1_i32 : i32
    %c2_i32_1 = arith.constant 2 : i32
    %8 = arith.subi %7, %c2_i32_1 : i32
    %c0_i32_2 = arith.constant 0 : i32
    %c0_i32_3 = arith.constant 0 : i32
    %9 = arith.maxsi %c0_i32_2, %8 : i32
    %10 = arith.minsi %c0_i32_3, %9 : i32
    %11 = arith.subi %8, %10 : i32
    %12 = tpu.memref_slice %arg2[%10, %1] : memref<8x128xf32, #tpu.memory_space<any>> -> memref<8x128xf32, #tpu.memory_space<any>>
    %c8_i32_4 = arith.constant 8 : i32
    %c0_i32_5 = arith.constant 0 : i32
    %13 = tpu.memref_slice %arg4[%2, %c8_i32_4, %c0_i32_5] : memref<2x24x128xf32, #tpu.memory_space<vmem>> -> memref<1x8x128xf32, #tpu.memory_space<vmem>>
    %14 = tpu.memref_squeeze %13 : memref<1x8x128xf32, #tpu.memory_space<vmem>> -> memref<8x128xf32, #tpu.memory_space<vmem>>
    %15 = tpu.memref_slice %arg5[%2] : memref<2x!tpu.dma_semaphore, #tpu.memory_space<semaphore_mem>> -> memref<1x!tpu.dma_semaphore, #tpu.memory_space<semaphore_mem>>
    %16 = tpu.memref_squeeze %15 : memref<1x!tpu.dma_semaphore, #tpu.memory_space<semaphore_mem>> -> memref<!tpu.dma_semaphore, #tpu.memory_space<semaphore_mem>>
    tpu.wait_dma2 semaphore(%16 : memref<!tpu.dma_semaphore, #tpu.memory_space<semaphore_mem>>) src(%12 : memref<8x128xf32, #tpu.memory_space<any>>) dst(%14 : memref<8x128xf32, #tpu.memory_space<vmem>>)
    %c1_i32_6 = arith.constant 1 : i32
    %17 = arith.addi %arg1, %c1_i32_6 : i32
    %c1_i32_7 = arith.constant 1 : i32
    %18 = arith.cmpi slt, %17, %c1_i32_7 : i32
    %19 = arith.extui %18 : i1 to i32
    %c0_i32_8 = arith.constant 0 : i32
    %20 = arith.cmpi ne, %19, %c0_i32_8 : i32
    scf.if %20 {
      %c1_i32_47 = arith.constant 1 : i32
      %76 = arith.addi %arg1, %c1_i32_47 : i32
      %c1_i32_48 = arith.constant 1 : i32
      %77 = arith.subi %c1_i32_48, %2 : i32
      %c8_i32_49 = arith.constant 8 : i32
      %78 = arith.muli %76, %c8_i32_49 : i32
      %c1_i32_50 = arith.constant 1 : i32
      %79 = arith.muli %78, %c1_i32_50 : i32
      %c2_i32_51 = arith.constant 2 : i32
      %80 = arith.subi %79, %c2_i32_51 : i32
      %c0_i32_52 = arith.constant 0 : i32
      %c0_i32_53 = arith.constant 0 : i32
      %81 = arith.maxsi %c0_i32_52, %80 : i32
      %82 = arith.minsi %c0_i32_53, %81 : i32
      %83 = tpu.memref_slice %arg2[%82, %1] : memref<8x128xf32, #tpu.memory_space<any>> -> memref<8x128xf32, #tpu.memory_space<any>>
      %c8_i32_54 = arith.constant 8 : i32
      %c0_i32_55 = arith.constant 0 : i32
      %84 = tpu.memref_slice %arg4[%77, %c8_i32_54, %c0_i32_55] : memref<2x24x128xf32, #tpu.memory_space<vmem>> -> memref<1x8x128xf32, #tpu.memory_space<vmem>>
      %85 = tpu.memref_squeeze %84 : memref<1x8x128xf32, #tpu.memory_space<vmem>> -> memref<8x128xf32, #tpu.memory_space<vmem>>
      %86 = tpu.memref_slice %arg5[%77] : memref<2x!tpu.dma_semaphore, #tpu.memory_space<semaphore_mem>> -> memref<1x!tpu.dma_semaphore, #tpu.memory_space<semaphore_mem>>
      %87 = tpu.memref_squeeze %86 : memref<1x!tpu.dma_semaphore, #tpu.memory_space<semaphore_mem>> -> memref<!tpu.dma_semaphore, #tpu.memory_space<semaphore_mem>>
      tpu.enqueue_dma source(%83 : memref<8x128xf32, #tpu.memory_space<any>>) target(%85 : memref<8x128xf32, #tpu.memory_space<vmem>>) target_semaphore(%87 : memref<!tpu.dma_semaphore, #tpu.memory_space<semaphore_mem>>)
    } else {
    }
    %c0_i32_9 = arith.constant 0 : i32
    %c0_i32_10 = arith.constant 0 : i32
    %21 = tpu.memref_slice %arg4[%2, %c0_i32_9, %c0_i32_10] : memref<2x24x128xf32, #tpu.memory_space<vmem>> -> memref<1x24x128xf32, #tpu.memory_space<vmem>>
    %22 = tpu.memref_squeeze %21 : memref<1x24x128xf32, #tpu.memory_space<vmem>> -> memref<24x128xf32, #tpu.memory_space<vmem>>
    %c8 = arith.constant 8 : index
    %c0 = arith.constant 0 : index
    %23 = vector.load %22[%c8, %c0] : memref<24x128xf32, #tpu.memory_space<vmem>>, vector<1x128xf32>
    %24 = vector.shape_cast %23 : vector<1x128xf32> to vector<1x128xf32>
    %25 = vector.broadcast %24 : vector<1x128xf32> to vector<8x128xf32>
    %c0_i32_11 = arith.constant 0 : i32
    %c0_i32_12 = arith.constant 0 : i32
    %26 = tpu.memref_slice %arg4[%2, %c0_i32_11, %c0_i32_12] : memref<2x24x128xf32, #tpu.memory_space<vmem>> -> memref<1x24x128xf32, #tpu.memory_space<vmem>>
    %27 = tpu.memref_squeeze %26 : memref<1x24x128xf32, #tpu.memory_space<vmem>> -> memref<24x128xf32, #tpu.memory_space<vmem>>
    %c0_13 = arith.constant 0 : index
    %c0_14 = arith.constant 0 : index
    %28 = vector.load %27[%c0_13, %c0_14] : memref<24x128xf32, #tpu.memory_space<vmem>>, vector<8x128xf32>
    tpu.vector_store %27[%c0_13, %c0_14], %25 {strides = array<i32>} : memref<24x128xf32, #tpu.memory_space<vmem>>, vector<8x128xf32>,
    %c0_i32_15 = arith.constant 0 : i32
    %c0_i32_16 = arith.constant 0 : i32
    %29 = tpu.memref_slice %arg4[%2, %c0_i32_15, %c0_i32_16] : memref<2x24x128xf32, #tpu.memory_space<vmem>> -> memref<1x24x128xf32, #tpu.memory_space<vmem>>
    %30 = tpu.memref_squeeze %29 : memref<1x24x128xf32, #tpu.memory_space<vmem>> -> memref<24x128xf32, #tpu.memory_space<vmem>>
    %c15 = arith.constant 15 : index
    %c0_17 = arith.constant 0 : index
    %31 = vector.load %30[%c15, %c0_17] : memref<24x128xf32, #tpu.memory_space<vmem>>, vector<1x128xf32>
    %32 = vector.shape_cast %31 : vector<1x128xf32> to vector<1x128xf32>
    %33 = vector.broadcast %32 : vector<1x128xf32> to vector<8x128xf32>
    %c0_i32_18 = arith.constant 0 : i32
    %c0_i32_19 = arith.constant 0 : i32
    %34 = tpu.memref_slice %arg4[%2, %c0_i32_18, %c0_i32_19] : memref<2x24x128xf32, #tpu.memory_space<vmem>> -> memref<1x24x128xf32, #tpu.memory_space<vmem>>
    %35 = tpu.memref_squeeze %34 : memref<1x24x128xf32, #tpu.memory_space<vmem>> -> memref<24x128xf32, #tpu.memory_space<vmem>>
    %c16 = arith.constant 16 : index
    %c0_20 = arith.constant 0 : index
    %36 = vector.load %35[%c16, %c0_20] : memref<24x128xf32, #tpu.memory_space<vmem>>, vector<8x128xf32>
    tpu.vector_store %35[%c16, %c0_20], %33 {strides = array<i32>} : memref<24x128xf32, #tpu.memory_space<vmem>>, vector<8x128xf32>,
    %cst = arith.constant 0.000000e+00 : f32
    %37 = vector.broadcast %cst : f32 to vector<8x128xf32>
    %c8_i32_21 = arith.constant 8 : i32
    %38 = arith.addi %c8_i32_21, %11 : i32
    %c0_i32_22 = arith.constant 0 : i32
    %39 = arith.addi %38, %c0_i32_22 : i32
    %c0_i32_23 = arith.constant 0 : i32
    %c0_i32_24 = arith.constant 0 : i32
    %40 = tpu.memref_slice %arg4[%2, %c0_i32_23, %c0_i32_24] : memref<2x24x128xf32, #tpu.memory_space<vmem>> -> memref<1x24x128xf32, #tpu.memory_space<vmem>>
    %41 = tpu.memref_squeeze %40 : memref<1x24x128xf32, #tpu.memory_space<vmem>> -> memref<24x128xf32, #tpu.memory_space<vmem>>
    %42 = arith.index_cast %39 : i32 to index
    %c0_25 = arith.constant 0 : index
    %43 = vector.load %41[%42, %c0_25] : memref<24x128xf32, #tpu.memory_space<vmem>>, vector<8x128xf32>
    %44 = arith.addf %37, %43 : vector<8x128xf32>
    %c8_i32_26 = arith.constant 8 : i32
    %45 = arith.addi %c8_i32_26, %11 : i32
    %c1_i32_27 = arith.constant 1 : i32
    %46 = arith.addi %45, %c1_i32_27 : i32
    %c0_i32_28 = arith.constant 0 : i32
    %c0_i32_29 = arith.constant 0 : i32
    %47 = tpu.memref_slice %arg4[%2, %c0_i32_28, %c0_i32_29] : memref<2x24x128xf32, #tpu.memory_space<vmem>> -> memref<1x24x128xf32, #tpu.memory_space<vmem>>
    %48 = tpu.memref_squeeze %47 : memref<1x24x128xf32, #tpu.memory_space<vmem>> -> memref<24x128xf32, #tpu.memory_space<vmem>>
    %49 = arith.index_cast %46 : i32 to index
    %c0_30 = arith.constant 0 : index
    %50 = vector.load %48[%49, %c0_30] : memref<24x128xf32, #tpu.memory_space<vmem>>, vector<8x128xf32>
    %51 = arith.addf %44, %50 : vector<8x128xf32>
    %c8_i32_31 = arith.constant 8 : i32
    %52 = arith.addi %c8_i32_31, %11 : i32
    %c2_i32_32 = arith.constant 2 : i32
    %53 = arith.addi %52, %c2_i32_32 : i32
    %c0_i32_33 = arith.constant 0 : i32
    %c0_i32_34 = arith.constant 0 : i32
    %54 = tpu.memref_slice %arg4[%2, %c0_i32_33, %c0_i32_34] : memref<2x24x128xf32, #tpu.memory_space<vmem>> -> memref<1x24x128xf32, #tpu.memory_space<vmem>>
    %55 = tpu.memref_squeeze %54 : memref<1x24x128xf32, #tpu.memory_space<vmem>> -> memref<24x128xf32, #tpu.memory_space<vmem>>
    %56 = arith.index_cast %53 : i32 to index
    %c0_35 = arith.constant 0 : index
    %57 = vector.load %55[%56, %c0_35] : memref<24x128xf32, #tpu.memory_space<vmem>>, vector<8x128xf32>
    %58 = arith.addf %51, %57 : vector<8x128xf32>
    %c8_i32_36 = arith.constant 8 : i32
    %59 = arith.addi %c8_i32_36, %11 : i32
    %c3_i32 = arith.constant 3 : i32
    %60 = arith.addi %59, %c3_i32 : i32
    %c0_i32_37 = arith.constant 0 : i32
    %c0_i32_38 = arith.constant 0 : i32
    %61 = tpu.memref_slice %arg4[%2, %c0_i32_37, %c0_i32_38] : memref<2x24x128xf32, #tpu.memory_space<vmem>> -> memref<1x24x128xf32, #tpu.memory_space<vmem>>
    %62 = tpu.memref_squeeze %61 : memref<1x24x128xf32, #tpu.memory_space<vmem>> -> memref<24x128xf32, #tpu.memory_space<vmem>>
    %63 = arith.index_cast %60 : i32 to index
    %c0_39 = arith.constant 0 : index
    %64 = vector.load %62[%63, %c0_39] : memref<24x128xf32, #tpu.memory_space<vmem>>, vector<8x128xf32>
    %65 = arith.addf %58, %64 : vector<8x128xf32>
    %c8_i32_40 = arith.constant 8 : i32
    %66 = arith.addi %c8_i32_40, %11 : i32
    %c4_i32 = arith.constant 4 : i32
    %67 = arith.addi %66, %c4_i32 : i32
    %c0_i32_41 = arith.constant 0 : i32
    %c0_i32_42 = arith.constant 0 : i32
    %68 = tpu.memref_slice %arg4[%2, %c0_i32_41, %c0_i32_42] : memref<2x24x128xf32, #tpu.memory_space<vmem>> -> memref<1x24x128xf32, #tpu.memory_space<vmem>>
    %69 = tpu.memref_squeeze %68 : memref<1x24x128xf32, #tpu.memory_space<vmem>> -> memref<24x128xf32, #tpu.memory_space<vmem>>
    %70 = arith.index_cast %67 : i32 to index
    %c0_43 = arith.constant 0 : index
    %71 = vector.load %69[%70, %c0_43] : memref<24x128xf32, #tpu.memory_space<vmem>>, vector<8x128xf32>
    %72 = arith.addf %65, %71 : vector<8x128xf32>
    %cst_44 = arith.constant 2.000000e-01 : f32
    %73 = vector.broadcast %cst_44 : f32 to vector<8x128xf32>
    %74 = arith.mulf %72, %73 : vector<8x128xf32>
    %c0_45 = arith.constant 0 : index
    %c0_46 = arith.constant 0 : index
    %75 = vector.load %arg3[%c0_45, %c0_46] : memref<8x128xf32, #tpu.memory_space<vmem>>, vector<8x128xf32>
    tpu.vector_store %arg3[%c0_45, %c0_46], %74 {strides = array<i32>} : memref<8x128xf32, #tpu.memory_space<vmem>>, vector<8x128xf32>,
    return
  }
  func.func @transform_1(%arg0: i32, %arg1: i32) -> (i32, i32) {
    %c0_i32 = arith.constant 0 : i32
    return %arg1, %arg0 : i32, i32
  }
}

</mosaic_0001>

<llo_original>
// kernel: tpu_custom_call.1
$region0: #{tpu_custom_call.1}
  #allocation0 [shape = 'u32[]', space=smem, size = 0x4, offset = 0x4, fixed_abs, tag = 'smem constant byte address 0x4 - core index']
  #allocation1 [shape = 'u32[144,128]{1,0:T(1,128)}', space=vmem, size = 0x12000, scoped, tag = 'internal scratch']
  #allocation2 [shape = 'f32[2,24,128]{2,1,0:T(8,128)}', space=vmem, size = 0x6000, scoped, tag = 'scratch operand']
  #allocation3 [shape = 's32[2]{0}', space=sflag, size = 0x8, scoped, tag = 'scratch operand']
  #allocation6 [shape = 's32[]', space=sflag, size = 0x4, offset = 0, fixed_abs, tag = 'sflag constant byte address 0x0 - dummy sync flag']
  #allocation7 [shape = 's32[]', space=sflag, size = 0x4, offset = 0, fixed_abs, tag = 'sflag constant byte address 0x0 - dummy sync flag']
  #allocation8 [shape = 'u32[]', space=smem, size = 0x4, offset = 0x44, fixed_abs, tag = 'smem constant byte address 0x44 - assertion arg 0']
  #allocation9 [shape = 'u32[]', space=smem, size = 0x4, offset = 0x48, fixed_abs, tag = 'smem constant byte address 0x48 - assertion arg 1']
  #allocation10 [shape = 's32[]', space=sflag, size = 0x4, offset = 0, fixed_abs, tag = 'sflag constant byte address 0x0 - dummy sync flag']
  #allocation11 [shape = 's32[]', space=sflag, size = 0x4, offset = 0, fixed_abs, tag = 'sflag constant byte address 0x0 - dummy sync flag']
  %s0 = inlined_call_operand.hbm [shape: f32[8,128], index: 0, kind: input, shape index: {}]
  %s1 = inlined_call_operand.hbm [shape: f32[8,128], index: 1, kind: output, shape index: {}]
  %s2 = sld [smem:[#allocation0]]
  $region26: #{tpu_custom_call.1} parent=0
    _
  %s4 = ssub.s32 1, %s2
  %s5 = scalar_select 0, %s4, %s2
  $region1: #{tpu_custom_call.1} parent=0
    #allocation4 [shape = 'u8[4096]{0}', space=vmem, size = 0x1000, scoped, tag = 'output window, operand 0, single buffered']
    #allocation5 [shape = 's32[1]{0}', space=sflag, size = 0x4, scoped, tag = 'scoped memory for tpu_custom_call.1']
    %6 = vsyncpa [#allocation5], 0
    %s7 = smul.u32 0, 128
    %s8 = ssub.s32 0, 0
    %s9 = ssub.s32 0, 0
    %p10 = scmp.eq.s32.totalorder 0, 0
    // Predicated region
    $region2: #{tpu_custom_call.1} parent=1 // pred_check
      %p11 = pneg %p10
    $region3: #{tpu_custom_call.1} parent=1 // pred_check_branch
      %13 = sbr.rel (%p11) target = $region5
    $region4: #{tpu_custom_call.1} parent=1 // pred_region
      %s14 = smul.u32 0, 8
      %s15 = ssub.s32 %s14, 2
      %p16 = scmp.gt.s32.totalorder %s15, 0
      %s17 = scalar_select %p16, %s15, 0
      %p18 = scmp.lt.s32.totalorder %s17, 0
      %s19 = scalar_select %p18, %s17, 0
      %s20 = sshra.s32 %s7, 7
      %s21 = sand.u32 %s7, 127
      %s22 = sadd.s32 %s20, %s19
      %s23 = smul.addr %s22, 16
      %s24 = scalar_lea.hbm %s0, %s23
      %s25 = smul.u32 0, 24
      %s26 = sadd.s32 8, %s25
      %s27 = scalar_lea.vmem [#allocation2], %s26
      // Predicated region
      $region6: #{tpu_custom_call.1} parent=4 // pred_check
        _
      $region7: #{tpu_custom_call.1} parent=4 // pred_check_branch
        %29 = sbr.rel target = $region9
      $region8: #{tpu_custom_call.1} parent=4 // pred_region
        %30 = sst [smem:[#allocation8]] [#allocation7]
        %31 = sst [smem:[#allocation9]] [#allocation6]
      $region9: #{tpu_custom_call.1} parent=4 // pred_fallthru
        _
      %33 = shalt.err (0)
      %s35 = sshll.u32 %s27, 4
      %s36 = int_to_ptr.vmem [resolvable:$true] %s35
      %38 = dma.hbm_to_vmem [thread:$0]  %s24, 128, %s36, [#allocation3]
    $region5: #{tpu_custom_call.1} parent=1 // pred_fallthru
      _
    %s39 = smul.u32 0, 8
    %s40 = ssub.s32 %s39, 2
    %p41 = scmp.gt.s32.totalorder %s40, 0
    %s42 = scalar_select %p41, %s40, 0
    %p43 = scmp.lt.s32.totalorder %s42, 0
    %s44 = scalar_select %p43, %s42, 0
    %s45 = ssub.s32 %s40, %s44
    %s46 = smul.u32 8, 1
    %s47 = sshll.u32 %s46, 4
    %48 = dma.done [#allocation3], %s47
    %s49 = sadd.s32 0, 1
    %p50 = scmp.lt.s32.totalorder %s49, 1
    // Predicated region
    $region10: #{tpu_custom_call.1} parent=1 // pred_check
      %p51 = pneg %p50
    $region11: #{tpu_custom_call.1} parent=1 // pred_check_branch
      %53 = sbr.rel (%p51) target = $region13
    $region12: #{tpu_custom_call.1} parent=1 // pred_region
      %s54 = ssub.s32 1, 0
      %s55 = smul.u32 %s49, 8
      %s56 = ssub.s32 %s55, 2
      %p57 = scmp.gt.s32.totalorder %s56, 0
      %s58 = scalar_select %p57, %s56, 0
      %p59 = scmp.lt.s32.totalorder %s58, 0
      %s60 = scalar_select %p59, %s58, 0
      %s61 = sshra.s32 %s7, 7
      %s62 = sand.u32 %s7, 127
      %s63 = sadd.s32 %s61, %s60
      %s64 = smul.addr %s63, 16
      %s65 = scalar_lea.hbm %s0, %s64
      %s66 = smul.u32 %s54, 24
      %s67 = sadd.s32 8, %s66
      %s68 = scalar_lea.vmem [#allocation2], %s67
      %s69 = scalar_lea.sflag [#allocation3], %s54
      // Predicated region
      $region14: #{tpu_custom_call.1} parent=12 // pred_check
        _
      $region15: #{tpu_custom_call.1} parent=12 // pred_check_branch
        %71 = sbr.rel target = $region17
      $region16: #{tpu_custom_call.1} parent=12 // pred_region
        %72 = sst [smem:[#allocation8]] [#allocation11]
        %73 = sst [smem:[#allocation9]] [#allocation10]
      $region17: #{tpu_custom_call.1} parent=12 // pred_fallthru
        _
      %75 = shalt.err (0)
      %s77 = sshll.u32 %s68, 4
      %s78 = int_to_ptr.vmem [resolvable:$true] %s77
      %80 = dma.hbm_to_vmem [thread:$0]  %s65, 128, %s78, %s69
    $region13: #{tpu_custom_call.1} parent=1 // pred_fallthru
      _
    %s81 = smul.u32 0, 24
    %s82 = scalar_lea.vmem [#allocation2], %s81
    %v83 = vld [vmem:[%s82 + $0x8] sm:$0x1]
    %v84 = vlaneseq
    %v85 = vshrl.u32 %v84, 7
    %v86 = vsub.s32 0, %v85
    %v87 = vrot.slane %v83, %v86
    %88 = vst [vmem:[%s82] sm:$0xff] %v87
    %v89 = vld [vmem:[%s82 + $0xf] sm:$0x1]
    %v90 = vlaneseq
    %v91 = vshrl.u32 %v90, 7
    %v92 = vsub.s32 0, %v91
    %v93 = vrot.slane %v89, %v92
    %94 = vst [vmem:[%s82 + $0x10] sm:$0xff] %v93
    %s95 = sadd.s32 %s45, 8
    %s96 = scalar_lea.vmem %s82, %s95 [#allocation2]
    %v97 = vld [vmem:[%s96] sm:$0xff]
    %v98 = vadd.f32 %v97, 0.0
    %s99 = sadd.s32 %s45, 9
    %s100 = scalar_lea.vmem %s82, %s99 [#allocation2]
    %v101 = vld [vmem:[%s100] sm:$0xff]
    %v102 = vadd.f32 %v98, %v101
    %s103 = sadd.s32 %s45, 10
    %s104 = scalar_lea.vmem %s82, %s103 [#allocation2]
    %v105 = vld [vmem:[%s104] sm:$0xff]
    %v106 = vadd.f32 %v102, %v105
    %s107 = sadd.s32 %s45, 11
    %s108 = scalar_lea.vmem %s82, %s107 [#allocation2]
    %v109 = vld [vmem:[%s108] sm:$0xff]
    %v110 = vadd.f32 %v106, %v109
    %s111 = sadd.s32 %s45, 12
    %s112 = scalar_lea.vmem %s82, %s111 [#allocation2]
    %v113 = vld [vmem:[%s112] sm:$0xff]
    %v114 = vadd.f32 %v110, %v113
    %v115 = vmul.f32 %v114, 0.2
    %116 = vst [vmem:[#allocation4] sm:$0xff] %v115
    // Predicated region
    $region18: #{tpu_custom_call.1} parent=1 // pred_check
      _
    $region19: #{tpu_custom_call.1} parent=1 // pred_check_branch
      %118 = sbr.rel (0) target = $region21
    $region20: #{tpu_custom_call.1} parent=1 // pred_region
      %s120 = ssub.s32 128, 128
      %121 = vsyncadd [#allocation5], %s120
      %s123 = sshll.u32 [#allocation4], 4
      %s124 = int_to_ptr.vmem [resolvable:$true] %s123
      %126 = dma.vmem_to_hbm [thread:$0]  %s124, 128, %s1, [#allocation5]
    $region21: #{tpu_custom_call.1} parent=1 // pred_fallthru
      _
    // Predicated region
    $region22: #{tpu_custom_call.1} parent=1 // pred_check
      _
    $region23: #{tpu_custom_call.1} parent=1 // pred_check_branch
      %128 = sbr.rel (0) target = $region25
    $region24: #{tpu_custom_call.1} parent=1 // pred_region
      %129 = dma.done [#allocation5], 128
    $region25: #{tpu_custom_call.1} parent=1 // pred_fallthru
      _
    %130 = vsyncpa [#allocation5], 1
  %131 = vsyncmov [#allocation3]
  %s132 = vpop.sfrf %131
  %p133 = scmp.eq.s32.totalorder %s132, 0
  %p134 = pneg %p133
  %136 = shalt.err (%p134)
  %s137 = scalar_lea.sflag [#allocation3], 1
  %138 = vsyncmov %s137
  %s139 = vpop.sfrf %138
  %p140 = scmp.eq.s32.totalorder %s139, 0
  %p141 = pneg %p140
  %143 = shalt.err (%p141)

</llo_original>
